<compile_context>
chip_gen: v5e
topology: v5e:2x2
jax: 0.10.0
libtpu: 0.0.40
codegen_flags: <defaults>
</compile_context>

<pallas_src>
import jax
import jax.numpy as jnp
from jax.experimental import pallas as pl
from jax.experimental.pallas import tpu as pltpu


# --------------------------------------------------------------------------- #
# Helpers
# --------------------------------------------------------------------------- #
def _cdiv(a, b):
    return (a + b - 1) // b


def _round_up(a, b):
    return _cdiv(a, b) * b


def _sublane_pack(dtype):
    """Rows per native vreg tile: 8 for 4-byte, 16 for 2-byte, 32 for 1-byte dtypes."""
    return max(8, 32 // jnp.dtype(dtype).itemsize)


def _vmem_capacity_bytes():
    """Physical VMEM per core; conservative 64 MiB (v7x) if the query is unavailable."""
    try:
        info = pltpu.get_tpu_info()
        for attr in ("vmem_capacity_bytes", "vmem_bytes", "vmem_size_bytes"):
            v = getattr(info, attr, None)
            if v:
                return int(v)
    except Exception:
        pass
    return 64 * 1024 * 1024


def _pick_lane(n):
    for cand in (1024, 512, 256, 128):
        if n % cand == 0:
            return cand
    return None


# --------------------------------------------------------------------------- #
# Kernels
# --------------------------------------------------------------------------- #
def _fused_normalize_kernel(x_ref, o_ref):
    """Whole sample resident in VMEM: min/max reduce + normalize in one pass (2N traffic)."""
    x = x_ref[...]                                    # (1, rows, lane), native dtype
    mn = jnp.min(x).astype(jnp.float32)
    mx = jnp.max(x).astype(jnp.float32)
    scale = 1.0 / (mx - mn + 1e-6)                    # one divide per sample
    offset = -mn * scale
    o_ref[...] = (x.astype(jnp.float32) * scale + offset).astype(o_ref.dtype)


def _make_minmax_kernel(rows_valid, tr, ar, lane, n_half, need_mask, dtype):
    """Pass 1: tiled per-sample min/max kept in elementwise (ar, lane) accumulators."""
    groups = tr // ar
    if jnp.issubdtype(jnp.dtype(dtype), jnp.floating):
        hi_sent, lo_sent = float("inf"), float("-inf")
    else:
        info = jnp.iinfo(dtype)
        hi_sent, lo_sent = int(info.max), int(info.min)

    def kernel(x_ref, min_ref, max_ref):
        t = pl.program_id(2)

        @pl.when(t == 0)
        def _init():
            min_ref[...] = jnp.full(min_ref.shape, jnp.inf, jnp.float32)
            max_ref[...] = jnp.full(max_ref.shape, -jnp.inf, jnp.float32)

        x = x_ref[...]                                # (1, tr, lane), native dtype
        if need_mask:
            h = pl.program_id(1)
            r0 = (h * n_half + t) * tr
            rid = r0 + jax.lax.broadcasted_iota(jnp.int32, (1, tr, lane), 1)
            valid = rid < rows_valid
            x_min = jnp.where(valid, x, jnp.asarray(hi_sent, dtype))
            x_max = jnp.where(valid, x, jnp.asarray(lo_sent, dtype))
        else:
            x_min = x
            x_max = x
        # Fold tr rows to ar rows with pure-VPU elementwise min/max (no per-tile XLU
        # tree reduce); the single cross-lane reduce happens once in the wrapper.
        pm = jnp.min(x_min.reshape(groups, ar, lane), axis=0)
        px = jnp.max(x_max.reshape(groups, ar, lane), axis=0)
        pm = pm.astype(jnp.float32).reshape(1, 1, ar, lane)
        px = px.astype(jnp.float32).reshape(1, 1, ar, lane)
        min_ref[...] = jnp.minimum(min_ref[...], pm)
        max_ref[...] = jnp.maximum(max_ref[...], px)

    return kernel


def _apply_normalize_kernel(scale_sm, offset_sm, x_ref, o_ref):
    """Pass 2: y = x * scale + offset in f32 (per-sample scalars prefetched to SMEM)."""
    b = pl.program_id(0)
    xf = x_ref[...].astype(jnp.float32)
    o_ref[...] = (xf * scale_sm[b] + offset_sm[b]).astype(o_ref.dtype)


# --------------------------------------------------------------------------- #
# Wrapper
# --------------------------------------------------------------------------- #
def normalize_layer(x, *,
                    pass1_block_bytes=4 << 20,
                    pass2_block_bytes=2 << 20,
                    fused_vmem_fraction=0.8,
                    force_two_pass=False):
    """x: (B, C, H, W) [or any (B, ...)] -> same shape, per-sample min/max normalized."""
    orig_shape = x.shape
    dtype = x.dtype
    isz = jnp.dtype(dtype).itemsize
    pack = _sublane_pack(dtype)
    cap = _vmem_capacity_bytes()

    B = orig_shape[0]
    N = 1
    for d in orig_shape[1:]:
        N *= d

    # ---- lane-dense layout (B, rows, lane); free bitcast when N % 128 == 0 ----
    if N % 128 == 0:
        n_pad, padded = N, False
    else:
        # Fallback only: edge-pad + final slice each cost an extra HBM pass.
        n_pad, padded = _round_up(N, 128), True
    lane = _pick_lane(n_pad)
    rows = n_pad // lane

    xf = x.reshape(B, N)
    if padded:
        xf = jnp.pad(xf, ((0, 0), (0, n_pad - N)), mode="edge")  # repeats sample values
    xp = xf.reshape(B, rows, lane)

    # ---- fused-path gate: whole sample resident; VMEM-capacity aware ----
    sample_bytes = rows * lane * isz
    sample_f32 = rows * lane * 4
    fused_need = 4 * sample_bytes + 2 * sample_f32 + (4 << 20)   # in/out dbl-buffer + f32 temps
    use_fused = ((not force_two_pass) and B >= 2
                 and fused_need <= int(fused_vmem_fraction * cap))

    if use_fused:
        out = pl.pallas_call(
            _fused_normalize_kernel,
            out_shape=jax.ShapeDtypeStruct((B, rows, lane), dtype),
            grid_spec=pltpu.PrefetchScalarGridSpec(
                num_scalar_prefetch=0,
                grid=(B,),
                in_specs=[pl.BlockSpec((1, rows, lane), lambda b: (b, 0, 0))],
                out_specs=pl.BlockSpec((1, rows, lane), lambda b: (b, 0, 0)),
            ),
            compiler_params=pltpu.CompilerParams(
                dimension_semantics=("parallel",),
                vmem_limit_bytes=min(int(0.9 * cap), fused_need + (4 << 20)),
            ),
        )(xp)
    else:
        pass1_block_bytes = max(lane * isz, min(pass1_block_bytes, cap // 8))
        pass2_block_bytes = max(lane * isz, min(pass2_block_bytes, cap // 10))

        def _pick_tr(target_bytes):
            if rows * lane * isz <= target_bytes or rows <= pack:
                return rows                                      # full extent (== array dim)
            return max(pack,
                       min(target_bytes // (lane * isz) // pack, rows // pack) * pack)

        # ---------- pass 1: tiled min/max reduction ----------
        tr1 = _pick_tr(pass1_block_bytes)
        ar1 = pack if tr1 % pack == 0 else tr1
        n_tiles1 = _cdiv(rows, tr1)
        # Split tile axis into 2 parallel halves for odd/unit batch (megacore on v7x).
        np_split = 2 if (B % 2 == 1 and n_tiles1 >= 2 and n_tiles1 % 2 == 0) else 1
        n_half = n_tiles1 // np_split
        need_mask = n_tiles1 * tr1 != rows
        blk1_bytes = tr1 * lane * isz

        mins, maxs = pl.pallas_call(
            _make_minmax_kernel(rows, tr1, ar1, lane, n_half, need_mask, dtype),
            out_shape=(jax.ShapeDtypeStruct((B, np_split, ar1, lane), jnp.float32),
                       jax.ShapeDtypeStruct((B, np_split, ar1, lane), jnp.float32)),
            grid_spec=pltpu.PrefetchScalarGridSpec(
                num_scalar_prefetch=0,
                grid=(B, np_split, n_half),
                in_specs=[pl.BlockSpec((1, tr1, lane),
                                       lambda b, h, t: (b, h * n_half + t, 0))],
                out_specs=[pl.BlockSpec((1, 1, ar1, lane), lambda b, h, t: (b, h, 0, 0)),
                           pl.BlockSpec((1, 1, ar1, lane), lambda b, h, t: (b, h, 0, 0))],
            ),
            compiler_params=pltpu.CompilerParams(
                dimension_semantics=("parallel", "parallel", "arbitrary"),
                vmem_limit_bytes=min(int(0.9 * cap), 4 * blk1_bytes + (8 << 20)),
            ),
        )(xp)

        # Single cross-lane reduce + one reciprocal per sample (hoisted out of kernels).
        min_vals = jnp.min(mins, axis=(1, 2, 3))                  # (B,) f32
        max_vals = jnp.max(maxs, axis=(1, 2, 3))                  # (B,) f32
        scales = 1.0 / (max_vals - min_vals + 1e-6)               # (B,) f32
        offsets = -min_vals * scales                              # (B,) f32

        # ---------- pass 2: tiled x * scale + offset ----------
        tr2 = _pick_tr(pass2_block_bytes)
        n_tiles2 = _cdiv(rows, tr2)
        blk2_bytes = tr2 * lane * isz
        blk2_f32 = tr2 * lane * 4

        out = pl.pallas_call(
            _apply_normalize_kernel,
            out_shape=jax.ShapeDtypeStruct((B, rows, lane), dtype),
            grid_spec=pltpu.PrefetchScalarGridSpec(
                num_scalar_prefetch=2,
                grid=(B, n_tiles2),
                in_specs=[pl.BlockSpec((1, tr2, lane), lambda b, t, *_: (b, t, 0))],
                out_specs=pl.BlockSpec((1, tr2, lane), lambda b, t, *_: (b, t, 0)),
            ),
            compiler_params=pltpu.CompilerParams(
                dimension_semantics=("parallel", "parallel"),
                vmem_limit_bytes=min(int(0.9 * cap),
                                     4 * blk2_bytes + 3 * blk2_f32 + (8 << 20)),
            ),
        )(scales, offsets, xp)

    out = out.reshape(B, n_pad)
    if padded:
        out = out[:, :N]
    return out.reshape(orig_shape)


def normalize_layer_ref(x):
    """Pure-JAX reference matching the PyTorch forward."""
    axes = tuple(range(1, x.ndim))
    min_val = jnp.min(x, axis=axes, keepdims=True)
    max_val = jnp.max(x, axis=axes, keepdims=True)
    return (x - min_val) / (max_val - min_val + 1e-6)


# --------------------------------------------------------------------------- #
# Test
# --------------------------------------------------------------------------- #
if __name__ == "__main__":
    key = jax.random.PRNGKey(0)

    # 1) Fused path (B >= 2, sample fits VMEM), lane-dense zero-copy layout.
    B, C, H, W = 2, 4, 16, 16
    x = jax.random.normal(key, (B, C, H, W), dtype=jnp.float32)
    ref = normalize_layer_ref(x)
    out_fused = jax.block_until_ready(normalize_layer(x))
    assert out_fused.shape == (B, C, H, W)
    assert jnp.allclose(out_fused, ref, atol=1e-5, rtol=1e-5), "fused path mismatch"

    # 2) Two-pass tiled path on the same input.
    out_2p = jax.block_until_ready(normalize_layer(x, force_two_pass=True))
    assert jnp.allclose(out_2p, ref, atol=1e-5, rtol=1e-5), "two-pass mismatch"

    # 3) B == 1, ragged rows (13 rows, 8-row tiles) -> exercises in-kernel masking,
    #    the parallel half-split of the reduction axis, and multi-tile pass 2.
    x3 = jax.random.normal(jax.random.PRNGKey(0), (1, 13, 32, 32), dtype=jnp.float32)
    out3 = jax.block_until_ready(
        normalize_layer(x3, force_two_pass=True,
                        pass1_block_bytes=32 * 1024, pass2_block_bytes=32 * 1024))
    assert jnp.allclose(out3, normalize_layer_ref(x3), atol=1e-5, rtol=1e-5), \
        "masked multi-tile two-pass mismatch"

    # 4) N not a multiple of 128 -> edge-pad fallback path (fused and two-pass).
    x4 = jax.random.normal(jax.random.PRNGKey(0), (2, 8, 30, 34), dtype=jnp.float32)
    ref4 = normalize_layer_ref(x4)
    out4f = jax.block_until_ready(normalize_layer(x4))
    out4t = jax.block_until_ready(normalize_layer(x4, force_two_pass=True))
    assert jnp.allclose(out4f, ref4, atol=1e-5, rtol=1e-5), "padded fused mismatch"
    assert jnp.allclose(out4t, ref4, atol=1e-5, rtol=1e-5), "padded two-pass mismatch"

    # 5) bf16 (16-row sublane packing, f32 in-kernel math, group folds in pass 1).
    x5 = jax.random.normal(jax.random.PRNGKey(0), (1, 64, 32, 32),
                           dtype=jnp.float32).astype(jnp.bfloat16)
    out5 = jax.block_until_ready(
        normalize_layer(x5, force_two_pass=True,
                        pass1_block_bytes=64 * 1024, pass2_block_bytes=64 * 1024))
    ref5 = normalize_layer_ref(x5.astype(jnp.float32))
    assert jnp.allclose(out5.astype(jnp.float32), ref5, atol=1e-2), "bf16 mismatch"

    print("KERNEL_OK")
</pallas_src>

<mosaic_0001>
module attributes {stable_mosaic.version = 11 : i64} {
  func.func @_fused_normalize_kernel(%arg0: i32, %arg1: memref<1x1x1024xf32, #tpu.memory_space<vmem>>, %arg2: memref<1x1x1024xf32, #tpu.memory_space<vmem>>) attributes {dimension_semantics = [#tpu.dimension_semantics<parallel>], iteration_bounds = array<i64: 2>, scalar_prefetch = 0 : i64, scratch_operands = 0 : i64, tpu.core_type = #tpu.core_type<tc>, window_params = [{transform_indices = @transform_0, window_bounds = array<i64: 1, 1, 1024>}, {transform_indices = @transform_1, window_bounds = array<i64: 1, 1, 1024>}]} {
    %c0 = arith.constant 0 : index
    %c0_0 = arith.constant 0 : index
    %c0_1 = arith.constant 0 : index
    %0 = vector.load %arg1[%c0, %c0_0, %c0_1] : memref<1x1x1024xf32, #tpu.memory_space<vmem>>, vector<1x1x1024xf32>
    %1 = vector.shape_cast %0 : vector<1x1x1024xf32> to vector<1x1x1x1024xf32>
    %cst = arith.constant dense<0x7F800000> : vector<1xf32>
    %2 = vector.multi_reduction <minimumf>, %1, %cst [1, 2, 3] : vector<1x1x1x1024xf32> to vector<1xf32>
    %3 = vector.shape_cast %2 : vector<1xf32> to vector<1x1x1x1xf32>
    %4 = vector.extract %3[0, 0, 0, 0] : f32 from vector<1x1x1x1xf32>
    %5 = vector.shape_cast %0 : vector<1x1x1024xf32> to vector<1x1x1x1024xf32>
    %cst_2 = arith.constant dense<0xFF800000> : vector<1xf32>
    %6 = vector.multi_reduction <maximumf>, %5, %cst_2 [1, 2, 3] : vector<1x1x1x1024xf32> to vector<1xf32>
    %7 = vector.shape_cast %6 : vector<1xf32> to vector<1x1x1x1xf32>
    %8 = vector.extract %7[0, 0, 0, 0] : f32 from vector<1x1x1x1xf32>
    %9 = arith.subf %8, %4 : f32
    %cst_3 = arith.constant 9.99999997E-7 : f32
    %10 = arith.addf %9, %cst_3 : f32
    %cst_4 = arith.constant 1.000000e+00 : f32
    %11 = arith.divf %cst_4, %10 : f32
    %cst_5 = arith.constant 0.000000e+00 : f32
    %12 = arith.subf %cst_5, %4 : f32
    %13 = arith.mulf %12, %11 : f32
    %14 = vector.broadcast %11 : f32 to vector<1x1x1024xf32>
    %15 = arith.mulf %0, %14 : vector<1x1x1024xf32>
    %16 = vector.broadcast %13 : f32 to vector<1x1x1024xf32>
    %17 = arith.addf %15, %16 : vector<1x1x1024xf32>
    %c0_6 = arith.constant 0 : index
    %c0_7 = arith.constant 0 : index
    %c0_8 = arith.constant 0 : index
    %18 = vector.load %arg2[%c0_6, %c0_7, %c0_8] : memref<1x1x1024xf32, #tpu.memory_space<vmem>>, vector<1x1x1024xf32>
    tpu.vector_store %arg2[%c0_6, %c0_7, %c0_8], %17 {strides = array<i32>} : memref<1x1x1024xf32, #tpu.memory_space<vmem>>, vector<1x1x1024xf32>,
    return
  }
  func.func @transform_0(%arg0: i32) -> (i32, i32, i32) {
    %c0_i32 = arith.constant 0 : i32
    %c0_i32_0 = arith.constant 0 : i32
    %c0_i32_1 = arith.constant 0 : i32
    return %arg0, %c0_i32, %c0_i32_0 : i32, i32, i32
  }
  func.func @transform_1(%arg0: i32) -> (i32, i32, i32) {
    %c0_i32 = arith.constant 0 : i32
    %c0_i32_0 = arith.constant 0 : i32
    %c0_i32_1 = arith.constant 0 : i32
    return %arg0, %c0_i32, %c0_i32_0 : i32, i32, i32
  }
}

</mosaic_0001>

<llo_original>
// kernel: tpu_custom_call.1
$region0: #{tpu_custom_call.1}
  #allocation0 [shape = 'u32[]', space=smem, size = 0x4, offset = 0x4, fixed_abs, tag = 'smem constant byte address 0x4 - core index']
  #allocation1 [shape = 'u32[72,128]{1,0:T(1,128)}', space=vmem, size = 0x9000, scoped, tag = 'internal scratch']
  %s0 = inlined_call_operand.hbm [shape: f32[2,1,1024], index: 0, kind: input, shape index: {}]
  %s1 = inlined_call_operand.hbm [shape: f32[2,1,1024], index: 1, kind: output, shape index: {}]
  %s2 = sld [smem:[#allocation0]]
  $region41: #{tpu_custom_call.1} parent=0
    _
  %s4 = ssub.s32 1, %s2
  %s5 = scalar_select 0, %s4, %s2
  $region1: #{tpu_custom_call.1} parent=0
    #allocation2 [shape = 'u8[8192]{0}', space=vmem, size = 0x2000, scoped, tag = 'input window, operand 0']
    #allocation3 [shape = 's32[2]{0}', space=sflag, size = 0x8, scoped, tag = 'scoped memory for tpu_custom_call.1']
    #allocation4 [shape = 's32[2]{0}', space=sflag, size = 0x8, scoped, tag = 'scoped memory for tpu_custom_call.1']
    #allocation5 [shape = 'u8[8192]{0}', space=vmem, size = 0x2000, scoped, tag = 'output window, operand 0']
    %6 = vsyncpa [#allocation3], 0
    %s7 = scalar_lea.sflag [#allocation3], 1
    %8 = vsyncpa %s7, 0
    %9 = vsyncpa [#allocation4], 0
    %s10 = scalar_lea.sflag [#allocation4], 1
    %11 = vsyncpa %s10, 0
    loop: start=0, step=1, limit=4
    $region2: #{tpu_custom_call.1} parent=1 // loop_pre_header
      _
    $region3: #{tpu_custom_call.1} parent=1 // loop_header
      %s13 = sphi 0, %s17
      %p14 = scmp.ge.s32.totalorder %s13, 4
      %s23 = sphi 0, %s25
      %s26 = sphi 0, %s23
      %s27 = sphi 0, %s26
      %s43 = sphi 0, %s27
      %s49 = sphi 0, %s51
      %s52 = sphi 0, %s49
      %s53 = sphi 0, %s52
      %s69 = sphi 0, %s53
    $region4: #{tpu_custom_call.1} parent=1 // loop_header_branch
      %16 = sbr.rel (%p14) target = $region8
    $region5: #{tpu_custom_call.1} parent=1 // loop_body
      %s18 = ssub.s32 %s13, 1
      %s19 = ssub.s32 %s13, 2
      %s20 = sadd.s32 %s13, 1
      %s21 = ssub.s32 %s13, %s20
      %p22 = scmp.eq.s32.totalorder %s21, 0
      %s24 = sadd.s32 %s23, 1
      %s25 = scalar_select %p22, %s23, %s24
      %p28 = pneg %p22
      %p29 = scmp.eq.s32.totalorder %s13, 1
      %p30 = por %p28, %p29
      %p31 = scmp.ne.s32.totalorder %s23, %s26
      %p32 = scmp.eq.s32.totalorder %s13, 0
      %p33 = por %p31, %p32
      %p34 = scmp.ne.s32.totalorder %s23, %s26
      %p35 = scmp.eq.s32.totalorder %s18, 1
      %p36 = por %p34, %p35
      %p37 = scmp.ne.s32.totalorder %s26, %s27
      %p38 = scmp.eq.s32.totalorder %s18, 0
      %p39 = por %p37, %p38
      %p40 = scmp.ne.s32.totalorder %s26, %s27
      %p41 = scmp.eq.s32.totalorder %s19, 1
      %p42 = por %p40, %p41
      %p44 = scmp.ne.s32.totalorder %s27, %s43
      %p45 = scmp.eq.s32.totalorder %s19, 0
      %p46 = por %p44, %p45
      %s47 = ssub.s32 %s13, %s20
      %p48 = scmp.eq.s32.totalorder %s47, 0
      %s50 = sadd.s32 %s49, 1
      %s51 = scalar_select %p48, %s49, %s50
      %p54 = pneg %p48
      %p55 = scmp.eq.s32.totalorder %s13, 1
      %p56 = por %p54, %p55
      %p57 = scmp.ne.s32.totalorder %s49, %s52
      %p58 = scmp.eq.s32.totalorder %s13, 0
      %p59 = por %p57, %p58
      %p60 = scmp.ne.s32.totalorder %s49, %s52
      %p61 = scmp.eq.s32.totalorder %s18, 1
      %p62 = por %p60, %p61
      %p63 = scmp.ne.s32.totalorder %s52, %s53
      %p64 = scmp.eq.s32.totalorder %s18, 0
      %p65 = por %p63, %p64
      %p66 = scmp.ne.s32.totalorder %s52, %s53
      %p67 = scmp.eq.s32.totalorder %s19, 1
      %p68 = por %p66, %p67
      %p70 = scmp.ne.s32.totalorder %s53, %s69
      %p71 = scmp.eq.s32.totalorder %s19, 0
      %p72 = por %p70, %p71
      %p73 = scmp.le.s32.totalorder 1, %s13
      %p74 = scmp.lt.s32.totalorder %s13, 3
      %p75 = pnand %p73, %p74
      %p76 = pneg %p75
      // Predicated region
      $region9: #{tpu_custom_call.1} parent=5 // pred_check
        _
      $region10: #{tpu_custom_call.1} parent=5 // pred_check_branch
        %78 = sbr.rel (%p75) target = $region12
      $region11: #{tpu_custom_call.1} parent=5 // pred_region
        %s79 = ssub.s32 %s13, 1
      $region12: #{tpu_custom_call.1} parent=5 // pred_fallthru
        _
      %p80 = scmp.lt.s32.totalorder %s13, 2
      // Predicated region
      $region13: #{tpu_custom_call.1} parent=5 // pred_check
        %p81 = pneg %p80
      $region14: #{tpu_custom_call.1} parent=5 // pred_check_branch
        %83 = sbr.rel (%p81) target = $region16
      $region15: #{tpu_custom_call.1} parent=5 // pred_region
        // Predicated region
        $region17: #{tpu_custom_call.1} parent=15 // pred_check
          %p84 = pneg %p33
        $region18: #{tpu_custom_call.1} parent=15 // pred_check_branch
          %86 = sbr.rel (%p84) target = $region20
        $region19: #{tpu_custom_call.1} parent=15 // pred_region
          %s87 = sand.u32 %s23, 1
          %s88 = scalar_lea.sflag [#allocation3], %s87
          %s89 = sand.u32 %s23, 1
          %s90 = smul.addr %s89, 8
          %s91 = scalar_lea.vmem [#allocation2], %s90
          %93 = vsyncadd %s88, 0
          %s94 = smul.addr %s13, 8
          %s95 = scalar_lea.hbm %s0, %s94
          %s97 = sshll.u32 %s95, 4
          %s98 = int_to_ptr.hbm [resolvable:$true] %s97
          %s99 = sshll.u32 %s91, 4
          %s100 = int_to_ptr.vmem [resolvable:$true] %s99
          %102 = dma.hbm_to_vmem [thread:$0]  %s98, 128, %s100, %s88
        $region20: #{tpu_custom_call.1} parent=15 // pred_fallthru
          _
      $region16: #{tpu_custom_call.1} parent=5 // pred_fallthru
        _
      %p103 = scmp.le.s32.totalorder 1, %s13
      %p104 = scmp.lt.s32.totalorder %s13, 3
      %p105 = pnand %p103, %p104
      %p106 = pneg %p105
      // Predicated region
      $region21: #{tpu_custom_call.1} parent=5 // pred_check
        _
      $region22: #{tpu_custom_call.1} parent=5 // pred_check_branch
        %108 = sbr.rel (%p105) target = $region24
      $region23: #{tpu_custom_call.1} parent=5 // pred_region
        %s109 = ssub.s32 %s13, 1
        %s110 = sand.u32 %s26, 1
        %s111 = scalar_lea.sflag [#allocation3], %s110
        %s112 = sand.u32 %s26, 1
        %s113 = smul.addr %s112, 8
        %s114 = scalar_lea.vmem [#allocation2], %s113
        // Predicated region
        $region25: #{tpu_custom_call.1} parent=23 // pred_check
          %p115 = pneg %p39
        $region26: #{tpu_custom_call.1} parent=23 // pred_check_branch
          %117 = sbr.rel (%p115) target = $region28
        $region27: #{tpu_custom_call.1} parent=23 // pred_region
          %119 = dma.done %s111, 128
        $region28: #{tpu_custom_call.1} parent=23 // pred_fallthru
          _
        %s120 = sand.u32 %s26, 1
        %s121 = scalar_lea.sflag [#allocation3], %s120
        %s122 = sand.u32 %s26, 1
        %s123 = smul.addr %s122, 8
        %s124 = scalar_lea.vmem [#allocation2], %s123
        %p125 = pneg %p39
        %p126 = pneg %p36
        %p127 = pneg %p65
        %p128 = pneg %p62
        %s129 = sand.u32 %s52, 1
        %s130 = scalar_lea.sflag [#allocation4], %s129
        %s131 = sand.u32 %s52, 1
        %s132 = smul.addr %s131, 8
        %s133 = scalar_lea.vmem [#allocation5], %s132
        %v134 = vld [vmem:[%s114] sm:$0xff]
        %v136 = vperm.slane %v134, 0
        %v137 = vperm.slane %v134, 1
        %v138 = vperm.slane %v134, 2
        %v139 = vperm.slane %v134, 3
        %v140 = vperm.slane %v134, 4
        %v141 = vperm.slane %v134, 5
        %v142 = vperm.slane %v134, 6
        %v143 = vperm.slane %v134, 7
        %vm152 = vcmask 1040384
        %v153 = vsel %vm152, %v136, inf
        %v154 = vsel %vm152, %v137, inf
        %v155 = vsel %vm152, %v138, inf
        %v156 = vsel %vm152, %v139, inf
        %v157 = vsel %vm152, %v140, inf
        %v158 = vmin.f32 %v153, %v157
        %v159 = vsel %vm152, %v141, inf
        %v160 = vmin.f32 %v154, %v159
        %v161 = vsel %vm152, %v142, inf
        %v162 = vmin.f32 %v155, %v161
        %v163 = vsel %vm152, %v143, inf
        %v164 = vmin.f32 %v156, %v163
        %v165 = vmin.f32 %v158, %v160
        %v166 = vmin.f32 %v162, %v164
        %v167 = vmin.f32 %v165, %v166
        %168 = vmin.xlane.f32.xlu0 %v167
        %v169 = vpop.xlane.xlu0 %168
        %v170 = vrot.slane %v169, 4
        %v171 = vmin.f32 %v169, %v170
        %v172 = vrot.slane %v171, 2
        %v173 = vmin.f32 %v171, %v172
        %v174 = vrot.slane %v173, 1
        %v175 = vmin.f32 %v173, %v174
        %s176 = vtos %v175
        %v177 = vsel %vm152, %v136, -inf
        %v178 = vsel %vm152, %v137, -inf
        %v179 = vsel %vm152, %v138, -inf
        %v180 = vsel %vm152, %v139, -inf
        %v181 = vsel %vm152, %v140, -inf
        %v182 = vmax.f32 %v177, %v181
        %v183 = vsel %vm152, %v141, -inf
        %v184 = vmax.f32 %v178, %v183
        %v185 = vsel %vm152, %v142, -inf
        %v186 = vmax.f32 %v179, %v185
        %v187 = vsel %vm152, %v143, -inf
        %v188 = vmax.f32 %v180, %v187
        %v189 = vmax.f32 %v182, %v184
        %v190 = vmax.f32 %v186, %v188
        %v191 = vmax.f32 %v189, %v190
        %192 = vmax.xlane.f32.xlu0 %v191
        %v193 = vpop.xlane.xlu0 %192
        %v194 = vrot.slane %v193, 4
        %v195 = vmax.f32 %v193, %v194
        %v196 = vrot.slane %v195, 2
        %v197 = vmax.f32 %v195, %v196
        %v198 = vrot.slane %v197, 1
        %v199 = vmax.f32 %v197, %v198
        %s200 = vtos %v199
        %s201 = ssub.f32 %s200, %s176
        %s202 = sadd.f32 %s201, 1e-06
        %v203 = vstv %s202
        %v204 = vrcp.pop %v203
        %v205 = vmul.f32 %v203, %v204
        %v206 = vsub.f32 1.0, %v205
        %v207 = vmul.f32 %v204, %v206
        %v208 = vadd.f32 %v204, %v207
        %vm209 = vweird.f32 %v203
        %vm210 = vweird.f32 %v204
        %vm211 = vmor %vm209, %vm210
        %v212 = vsel %vm211, %v204, %v208
        %v213 = vand.u32 2147483647, %v203
        %vm214 = vcmp.eq.f32.partialorder %v213, 8.507059e+37
        %v215 = vand.u32 %v203, 2147483648
        %v216 = vor.u32 1.1754944e-38, %v215
        %v217 = vsel %vm214, %v216, %v212
        %s218 = vtos %v217
        %s219 = ssub.f32 0.0, %s176
        %s220 = smul.f32 %s219, %s218
        %v221 = vstv %s218
        %v222 = vmul.f32 %v134, %v221
        %v223 = vstv %s220
        %v224 = vadd.f32 %v222, %v223
        %225 = vst [vmem:[%s133] sm:$0xff] %v224
        %s226 = sand.u32 %s52, 1
        %s227 = scalar_lea.sflag [#allocation4], %s226
        %s228 = sand.u32 %s52, 1
        %s229 = smul.addr %s228, 8
        %s230 = scalar_lea.vmem [#allocation5], %s229
        // Predicated region
        $region29: #{tpu_custom_call.1} parent=23 // pred_check
          %p231 = pneg %p62
        $region30: #{tpu_custom_call.1} parent=23 // pred_check_branch
          %233 = sbr.rel (%p231) target = $region32
        $region31: #{tpu_custom_call.1} parent=23 // pred_region
          %235 = vsyncadd %s227, 0
          %s236 = smul.addr %s18, 8
          %s237 = scalar_lea.hbm %s1, %s236
          %s239 = sshll.u32 %s230, 4
          %s240 = int_to_ptr.vmem [resolvable:$true] %s239
          %s241 = sshll.u32 %s237, 4
          %s242 = int_to_ptr.hbm [resolvable:$true] %s241
          %244 = dma.vmem_to_hbm [thread:$0]  %s240, 128, %s242, %s227
        $region32: #{tpu_custom_call.1} parent=23 // pred_fallthru
          _
      $region24: #{tpu_custom_call.1} parent=5 // pred_fallthru
        _
      %p245 = scmp.le.s32.totalorder 2, %s13
      // Predicated region
      $region33: #{tpu_custom_call.1} parent=5 // pred_check
        %p246 = pneg %p245
      $region34: #{tpu_custom_call.1} parent=5 // pred_check_branch
        %248 = sbr.rel (%p246) target = $region36
      $region35: #{tpu_custom_call.1} parent=5 // pred_region
        %s249 = ssub.s32 %s13, 2
        // Predicated region
        $region37: #{tpu_custom_call.1} parent=35 // pred_check
          %p250 = pneg %p68
        $region38: #{tpu_custom_call.1} parent=35 // pred_check_branch
          %252 = sbr.rel (%p250) target = $region40
        $region39: #{tpu_custom_call.1} parent=35 // pred_region
          %s253 = sand.u32 %s53, 1
          %s254 = scalar_lea.sflag [#allocation4], %s253
          %s255 = sand.u32 %s53, 1
          %s256 = smul.addr %s255, 8
          %s257 = scalar_lea.vmem [#allocation5], %s256
          %259 = dma.done %s254, 128
        $region40: #{tpu_custom_call.1} parent=35 // pred_fallthru
          _
      $region36: #{tpu_custom_call.1} parent=5 // pred_fallthru
        _
    $region6: #{tpu_custom_call.1} parent=1 // loop_footer
      %s17 = sadd.s32 1, %s13
    $region7: #{tpu_custom_call.1} parent=1 // loop_footer_branch
      %12 = sbr.rel target = $region3
    $region8: #{tpu_custom_call.1} parent=1 // loop_exit
      _
    %260 = vsyncpa [#allocation3], 1
    %s261 = scalar_lea.sflag [#allocation3], 1
    %262 = vsyncpa %s261, 1
    %263 = vsyncpa [#allocation4], 1
    %s264 = scalar_lea.sflag [#allocation4], 1
    %265 = vsyncpa %s264, 1

</llo_original>
